<compile_context>
chip_gen: v5e
topology: v5e:2x2
jax: 0.10.0
libtpu: 0.0.40
codegen_flags: <defaults>
</compile_context>

<pallas_src>
import functools

import jax
import jax.numpy as jnp
from jax.experimental import pallas as pl
from jax.experimental.pallas import tpu as pltpu


# ----------------------------------------------------------------------------
# Hardware-aware knobs
# ----------------------------------------------------------------------------
@functools.lru_cache(maxsize=None)
def _vmem_limit_bytes():
    """Generation-aware scoped-VMEM cap (fraction of physical, hard cap)."""
    cap = 64 * 1024 * 1024
    try:
        cap = int(pltpu.get_tpu_info().vmem_capacity_bytes)
    except Exception:
        pass
    return min(int(cap * 0.45), 64 * 1024 * 1024)


@functools.lru_cache(maxsize=None)
def _roll_toward_higher():
    """Probe pltpu.roll's rotate direction once (jnp.roll convention or not)."""
    def probe(x_ref, o_ref):
        o_ref[...] = pltpu.roll(x_ref[...], 1, axis=1)

    x = jnp.broadcast_to(jnp.arange(128, dtype=jnp.float32), (8, 128))
    y = pl.pallas_call(
        probe, out_shape=jax.ShapeDtypeStruct((8, 128), jnp.float32))(x)
    # jnp.roll convention: out[:, 1] == x[:, 0] == 0.
    return bool(jax.device_get(y)[0, 1] == 0.0)


# ----------------------------------------------------------------------------
# In-kernel helpers
# ----------------------------------------------------------------------------
def _shift_lanes(x, d, roll_up):
    """out[:, p] = x[:, (p + d) mod n]; wrap-around is masked by the caller."""
    n = x.shape[-1]
    s = (-d if roll_up else d) % n
    if s == 0:
        return x
    return pltpu.roll(x, s, axis=1)


def _conv3x3_taps(x, w_ref, *, H, W, roll_up):
    """3x3 'same' conv in the channel-major (C, H*W) lane-dense layout.

    x      : (Cin, H*W) compute-dtype value; flattened position p = ho*W + wo.
    w_ref  : (9, Cout, Cin) weight ref; tap index t = kh*3 + kw.
    Returns (Cout, H*W) float32: nine accumulating MXU dots whose taps are
    XLU lane rolls + VPU boundary masks (no im2col / padded scratch).
    """
    hw = x.shape[-1]
    cout = w_ref.shape[1]
    pos = jax.lax.broadcasted_iota(jnp.int32, (1, hw), 1)
    row, col = pos // W, pos % W
    row_ok = {d: (row + d >= 0) & (row + d < H) for d in (-1, 0, 1)}
    col_ok = {d: (col + d >= 0) & (col + d < W) for d in (-1, 0, 1)}

    acc = jnp.zeros((cout, hw), jnp.float32)
    for kh in range(3):
        dh = kh - 1
        for kw in range(3):
            dw = kw - 1
            tap = _shift_lanes(x, dh * W + dw, roll_up)
            if dh or dw:
                tap = tap * (row_ok[dh] & col_ok[dw]).astype(tap.dtype)
            acc = acc + jnp.dot(w_ref[kh * 3 + kw], tap,
                                preferred_element_type=jnp.float32)
    return acc


def _store_partial_stats(s_ref, y):
    """Per-block BN partials: column 0 = per-channel sum, column 1 = sumsq."""
    s_ref[:, 0:1] = jnp.sum(y, axis=1, keepdims=True)
    s_ref[:, 1:2] = jnp.sum(y * y, axis=1, keepdims=True)


# ----------------------------------------------------------------------------
# Kernels
# ----------------------------------------------------------------------------
def _conv_stats_kernel(x_ref, w_ref, y_ref, s_ref, *, H, W, roll_up):
    """conv1 (stride 1) on one sample + per-sample BN1 partial statistics."""
    y = _conv3x3_taps(x_ref[...], w_ref, H=H, W=W, roll_up=roll_up)
    _store_partial_stats(s_ref, y)
    y_ref[...] = y.astype(y_ref.dtype)


def _conv_strided_stats_kernel(x_ref, w_ref, d_ref, y_ref, s_ref, *, H, W,
                               roll_up):
    """conv1 (stride>1): full-res taps, then decimation via a 0/1 matmul."""
    y_full = _conv3x3_taps(x_ref[...], w_ref, H=H, W=W, roll_up=roll_up)
    y = jnp.dot(y_full, d_ref[...], preferred_element_type=jnp.float32)
    _store_partial_stats(s_ref, y)
    y_ref[...] = y.astype(y_ref.dtype)


def _bn_relu_conv_stats_kernel(y1_ref, sc_ref, sh_ref, w_ref, y2_ref, s_ref, *,
                               H, W, roll_up):
    """bn1 (folded per-channel scale/shift) -> relu -> conv2 + BN2 partials."""
    z = jnp.maximum(
        y1_ref[...].astype(jnp.float32) * sc_ref[...] + sh_ref[...], 0.0)
    y = _conv3x3_taps(z.astype(w_ref.dtype), w_ref, H=H, W=W, roll_up=roll_up)
    _store_partial_stats(s_ref, y)
    y2_ref[...] = y.astype(y2_ref.dtype)


def _bn_apply_kernel(y_ref, sc_ref, sh_ref, o_ref):
    """Elementwise BN2 apply; per-row (= per-channel) folded scale/shift."""
    o_ref[...] = (y_ref[...].astype(jnp.float32) * sc_ref[...]
                  + sh_ref[...]).astype(o_ref.dtype)


# ----------------------------------------------------------------------------
# Host-side glue
# ----------------------------------------------------------------------------
def _fold_bn(partials, gamma, beta, count, eps):
    """(N, C, 2) partial sum/sumsq -> per-channel (C, 1) scale & shift."""
    tot = jnp.sum(partials.astype(jnp.float32), axis=0)        # (C, 2)
    mean = tot[:, 0] / count
    var = jnp.maximum(tot[:, 1] / count - mean * mean, 0.0)    # biased variance
    scale = gamma.astype(jnp.float32) * jax.lax.rsqrt(var + eps)
    shift = beta.astype(jnp.float32) - mean * scale
    return scale.reshape(-1, 1), shift.reshape(-1, 1)


def _decimation_matrix(H, W, stride):
    """(H*W, Ho*Wo) 0/1 matrix selecting stride-decimated spatial positions."""
    Ho = (H - 1) // stride + 1
    Wo = (W - 1) // stride + 1
    p = jnp.arange(H * W)
    r, c = p // W, p % W
    keep = (r % stride == 0) & (c % stride == 0)
    q = (r // stride) * Wo + (c // stride)
    return (keep[:, None]
            & (q[:, None] == jnp.arange(Ho * Wo)[None, :])).astype(jnp.float32)


def _row_tile(rows):
    """Largest row tile dividing `rows` while keeping >= 2 grid steps."""
    for cand in (1024, 512, 256, 128, 64, 32, 16, 8, 4, 2):
        if rows % cand == 0 and rows // cand >= 2:
            return cand
    return rows


@functools.partial(jax.jit, static_argnames=("stride", "eps", "compute_dtype",
                                              "roll_up"))
def _basic_block_impl(x_nchw, w1_oihw, g1, b1, w2_oihw, g2, b2, *, stride, eps,
                      compute_dtype, roll_up):
    N, Cin, H, W = x_nchw.shape
    Cmid = w1_oihw.shape[0]
    Ho = (H - 1) // stride + 1
    Wo = (W - 1) // stride + 1
    HW, HoWo = H * W, Ho * Wo
    cdt = compute_dtype
    out_dtype = x_nchw.dtype

    # Channel-major lane-dense layout: NCHW -> (N, C, H*W) is a pure reshape,
    # so no input/output transposes are needed.
    x = x_nchw.reshape(N, Cin, HW).astype(cdt)
    w1t = jnp.transpose(w1_oihw, (2, 3, 0, 1)).reshape(9, Cmid, Cin).astype(cdt)
    w2t = jnp.transpose(w2_oihw, (2, 3, 0, 1)).reshape(9, Cmid, Cmid).astype(cdt)

    cparams = pltpu.CompilerParams(dimension_semantics=("parallel",),
                                   vmem_limit_bytes=_vmem_limit_bytes())

    # TODO(synk): for very large feature maps (e.g. a 112x112 stem) add a
    # second grid axis tiling the flattened spatial lanes with a 1-row halo;
    # at BasicBlock shapes the per-sample block is only a few hundred KB so a
    # per-sample grid already pipelines and balances across cores.

    # ---- phase 1: conv1 + per-sample BN1 partial statistics -----------------
    p1_out_shape = (jax.ShapeDtypeStruct((N, Cmid, HoWo), cdt),
                    jax.ShapeDtypeStruct((N, Cmid, 2), jnp.float32))
    p1_out_specs = (pl.BlockSpec((None, Cmid, HoWo), lambda n: (n, 0, 0)),
                    pl.BlockSpec((None, Cmid, 2), lambda n: (n, 0, 0)))
    if stride == 1:
        y1, s1 = pl.pallas_call(
            functools.partial(_conv_stats_kernel, H=H, W=W, roll_up=roll_up),
            out_shape=p1_out_shape,
            grid_spec=pltpu.PrefetchScalarGridSpec(
                num_scalar_prefetch=0, grid=(N,),
                in_specs=[pl.BlockSpec((None, Cin, HW), lambda n: (n, 0, 0)),
                          pl.BlockSpec((9, Cmid, Cin), lambda n: (0, 0, 0))],
                out_specs=p1_out_specs),
            compiler_params=cparams,
        )(x, w1t)
    else:
        dec = _decimation_matrix(H, W, stride)
        y1, s1 = pl.pallas_call(
            functools.partial(_conv_strided_stats_kernel, H=H, W=W,
                              roll_up=roll_up),
            out_shape=p1_out_shape,
            grid_spec=pltpu.PrefetchScalarGridSpec(
                num_scalar_prefetch=0, grid=(N,),
                in_specs=[pl.BlockSpec((None, Cin, HW), lambda n: (n, 0, 0)),
                          pl.BlockSpec((9, Cmid, Cin), lambda n: (0, 0, 0)),
                          pl.BlockSpec((HW, HoWo), lambda n: (0, 0))],
                out_specs=p1_out_specs),
            compiler_params=cparams,
        )(x, w1t, dec)

    # ---- global BN1 fold (tiny (N, C, 2) reduction) --------------------------
    count = float(N) * HoWo
    sc1, sh1 = _fold_bn(s1, g1, b1, count, eps)

    # ---- phase 2: bn1 + relu + conv2 + per-sample BN2 partial statistics -----
    y2, s2 = pl.pallas_call(
        functools.partial(_bn_relu_conv_stats_kernel, H=Ho, W=Wo,
                          roll_up=roll_up),
        out_shape=(jax.ShapeDtypeStruct((N, Cmid, HoWo), cdt),
                   jax.ShapeDtypeStruct((N, Cmid, 2), jnp.float32)),
        grid_spec=pltpu.PrefetchScalarGridSpec(
            num_scalar_prefetch=0, grid=(N,),
            in_specs=[pl.BlockSpec((None, Cmid, HoWo), lambda n: (n, 0, 0)),
                      pl.BlockSpec((Cmid, 1), lambda n: (0, 0)),
                      pl.BlockSpec((Cmid, 1), lambda n: (0, 0)),
                      pl.BlockSpec((9, Cmid, Cmid), lambda n: (0, 0, 0))],
            out_specs=(pl.BlockSpec((None, Cmid, HoWo), lambda n: (n, 0, 0)),
                       pl.BlockSpec((None, Cmid, 2), lambda n: (n, 0, 0)))),
        compiler_params=cparams,
    )(y1, sc1, sh1, w2t)

    # ---- global BN2 fold + row-tiled lane-dense elementwise epilogue ---------
    # In a full network this pass would be fused into the block's consumer and
    # emit the consumer's dtype; standalone it honors the module's dtype.
    sc2, sh2 = _fold_bn(s2, g2, b2, count, eps)
    rows = N * Cmid
    tr = _row_tile(rows)
    y2r = y2.reshape(rows, HoWo)                     # pure reshape
    sc2r = jnp.tile(sc2, (N, 1))                     # (rows, 1) per-row scale
    sh2r = jnp.tile(sh2, (N, 1))
    out = pl.pallas_call(
        _bn_apply_kernel,
        out_shape=jax.ShapeDtypeStruct((rows, HoWo), out_dtype),
        grid_spec=pltpu.PrefetchScalarGridSpec(
            num_scalar_prefetch=0, grid=(rows // tr,),
            in_specs=[pl.BlockSpec((tr, HoWo), lambda r: (r, 0)),
                      pl.BlockSpec((tr, 1), lambda r: (r, 0)),
                      pl.BlockSpec((tr, 1), lambda r: (r, 0))],
            out_specs=pl.BlockSpec((tr, HoWo), lambda r: (r, 0))),
        compiler_params=cparams,
    )(y2r, sc2r, sh2r)

    # (rows, Ho*Wo) -> NCHW is again a pure reshape: no output transpose.
    return out.reshape(N, Cmid, Ho, Wo)


def basic_block_forward(x_nchw, w1, g1, b1, w2, g2, b2, *, stride=1, eps=1e-5,
                        compute_dtype=jnp.bfloat16):
    """BasicBlock forward; input/output in NCHW (PyTorch convention)."""
    return _basic_block_impl(x_nchw, w1, g1, b1, w2, g2, b2, stride=stride,
                             eps=eps, compute_dtype=compute_dtype,
                             roll_up=_roll_toward_higher())


# ----------------------------------------------------------------------------
# Pure-JAX reference of the PyTorch BasicBlock forward (training-mode BN)
# ----------------------------------------------------------------------------
def ref_forward(x, w1, g1, b1, w2, g2, b2, *, stride=1, eps=1e-5):
    def conv(x, w, s):
        return jax.lax.conv_general_dilated(
            x, w, (s, s), ((1, 1), (1, 1)),
            dimension_numbers=('NCHW', 'OIHW', 'NCHW'))

    def bn(x, g, b):
        m = jnp.mean(x, axis=(0, 2, 3), keepdims=True)
        v = jnp.mean((x - m) ** 2, axis=(0, 2, 3), keepdims=True)
        return ((x - m) * jax.lax.rsqrt(v + eps) * g.reshape(1, -1, 1, 1)
                + b.reshape(1, -1, 1, 1))

    o = jax.nn.relu(bn(conv(x, w1, stride), g1, b1))
    return bn(conv(o, w2, 1), g2, b2)


if __name__ == "__main__":
    # TODO(synk): BatchNorm running_mean/running_var buffer updates are a
    # training-mode side effect with no functional output; not reproduced.
    N, inplanes, planes, H, W = 2, 4, 8, 16, 16

    key = jax.random.PRNGKey(0)
    k1, k2, k3, k4, k5, k6, k7, k8 = jax.random.split(key, 8)
    x = jax.random.normal(k1, (N, inplanes, H, W), jnp.float32)
    w1 = 0.1 * jax.random.normal(k2, (planes, inplanes, 3, 3), jnp.float32)
    w2 = 0.1 * jax.random.normal(k3, (planes, planes, 3, 3), jnp.float32)
    g1 = 1.0 + 0.1 * jax.random.normal(k4, (planes,), jnp.float32)
    b1 = 0.1 * jax.random.normal(k5, (planes,), jnp.float32)
    g2 = 1.0 + 0.1 * jax.random.normal(k6, (planes,), jnp.float32)
    b2 = 0.1 * jax.random.normal(k7, (planes,), jnp.float32)

    # stride=1, exact path: f32 MXU operands -> tight check vs f32 reference.
    ref = ref_forward(x, w1, g1, b1, w2, g2, b2, stride=1)
    out = jax.block_until_ready(
        basic_block_forward(x, w1, g1, b1, w2, g2, b2, stride=1,
                            compute_dtype=jnp.float32))
    assert out.shape == (N, planes, H, W), out.shape
    err = float(jnp.max(jnp.abs(out - ref)))
    if err > 2e-3:
        raise SystemExit(f"f32 stride=1 mismatch vs reference: max err = {err}")

    # stride=1, fast path: bf16 MXU operands, f32 accumulation / f32 BN stats.
    out_bf = jax.block_until_ready(
        basic_block_forward(x, w1, g1, b1, w2, g2, b2, stride=1,
                            compute_dtype=jnp.bfloat16))
    err_bf = float(jnp.max(jnp.abs(out_bf - ref)))
    if err_bf > 1e-1:
        raise SystemExit(f"bf16 stride=1 mismatch vs reference: max err = {err_bf}")

    # stride=2 downsampling path (decimation via the 0/1 selection matmul).
    x2 = jax.random.normal(k8, (N, inplanes, 32, 32), jnp.float32)
    ref2 = ref_forward(x2, w1, g1, b1, w2, g2, b2, stride=2)
    out2 = jax.block_until_ready(
        basic_block_forward(x2, w1, g1, b1, w2, g2, b2, stride=2,
                            compute_dtype=jnp.float32))
    assert out2.shape == (N, planes, 16, 16), out2.shape
    err2 = float(jnp.max(jnp.abs(out2 - ref2)))
    if err2 > 2e-3:
        raise SystemExit(f"f32 stride=2 mismatch vs reference: max err = {err2}")

    print("KERNEL_OK")
</pallas_src>

<mosaic_0001>
module attributes {stable_mosaic.version = 11 : i64} {
  func.func @probe(%arg0: memref<8x128xf32, #tpu.memory_space<vmem>>, %arg1: memref<8x128xf32, #tpu.memory_space<vmem>>) attributes {dimension_semantics = [], scalar_prefetch = 0 : i64, scratch_operands = 0 : i64, tpu.core_type = #tpu.core_type<tc>} {
    %c0 = arith.constant 0 : index
    %c0_0 = arith.constant 0 : index
    %0 = vector.load %arg0[%c0, %c0_0] : memref<8x128xf32, #tpu.memory_space<vmem>>, vector<8x128xf32>
    %c1_i32 = arith.constant 1 : i32
    %1 = tpu.dynamic_rotate %0 by %c1_i32 dim 1 : vector<8x128xf32>, i32 -> vector<8x128xf32>
    %c0_1 = arith.constant 0 : index
    %c0_2 = arith.constant 0 : index
    %2 = vector.load %arg1[%c0_1, %c0_2] : memref<8x128xf32, #tpu.memory_space<vmem>>, vector<8x128xf32>
    tpu.vector_store %arg1[%c0_1, %c0_2], %1 {strides = array<i32>} : memref<8x128xf32, #tpu.memory_space<vmem>>, vector<8x128xf32>,
    return
  }
}

</mosaic_0001>

<llo_original>
// kernel: tpu_custom_call.1
$region0: #{tpu_custom_call.1}
  #allocation0 [shape = 'u32[]', space=smem, size = 0x4, offset = 0x4, fixed_abs, tag = 'smem constant byte address 0x4 - core index']
  #allocation1 [shape = 'u32[72,128]{1,0:T(1,128)}', space=vmem, size = 0x9000, scoped, tag = 'internal scratch']
  %s0 = inlined_call_operand.hbm [shape: f32[8,128], index: 0, kind: input, shape index: {}]
  %s1 = inlined_call_operand.hbm [shape: f32[8,128], index: 1, kind: output, shape index: {}]
  %s2 = sld [smem:[#allocation0]]
  $region18: #{tpu_custom_call.1} parent=0
    _
  %s4 = ssub.s32 1, %s2
  %s5 = scalar_select 0, %s4, %s2
  $region1: #{tpu_custom_call.1} parent=0
    #allocation2 [shape = 'u8[4096]{0}', space=vmem, size = 0x1000, scoped, tag = 'input window, operand 0, single buffered']
    #allocation3 [shape = 's32[1]{0}', space=sflag, size = 0x4, scoped, tag = 'scoped memory for tpu_custom_call.1']
    #allocation4 [shape = 's32[1]{0}', space=sflag, size = 0x4, scoped, tag = 'scoped memory for tpu_custom_call.1']
    #allocation5 [shape = 'u8[4096]{0}', space=vmem, size = 0x1000, scoped, tag = 'output window, operand 0, single buffered']
    %6 = vsyncpa [#allocation3], 0
    %7 = vsyncpa [#allocation4], 0
    // Predicated region
    $region2: #{tpu_custom_call.1} parent=1 // pred_check
      _
    $region3: #{tpu_custom_call.1} parent=1 // pred_check_branch
      %9 = sbr.rel (0) target = $region5
    $region4: #{tpu_custom_call.1} parent=1 // pred_region
      %11 = vsyncadd [#allocation3], 0
      %s13 = sshll.u32 %s0, 4
      %s14 = int_to_ptr.hbm [resolvable:$true] %s13
      %s15 = sshll.u32 [#allocation2], 4
      %s16 = int_to_ptr.vmem [resolvable:$true] %s15
      %18 = dma.hbm_to_vmem [thread:$0]  %s14, 128, %s16, [#allocation3]
    $region5: #{tpu_custom_call.1} parent=1 // pred_fallthru
      _
    // Predicated region
    $region6: #{tpu_custom_call.1} parent=1 // pred_check
      _
    $region7: #{tpu_custom_call.1} parent=1 // pred_check_branch
      %20 = sbr.rel (0) target = $region9
    $region8: #{tpu_custom_call.1} parent=1 // pred_region
      %22 = dma.done [#allocation3], 128
    $region9: #{tpu_custom_call.1} parent=1 // pred_fallthru
      _
    %v23 = vld [vmem:[#allocation2] sm:$0xff]
    %24 = vrot.lane.b32.xlu0 %v23, 1
    %v25 = vpop.permute.xlu0 %24
    %26 = vst [vmem:[#allocation5] sm:$0xff] %v25
    // Predicated region
    $region10: #{tpu_custom_call.1} parent=1 // pred_check
      _
    $region11: #{tpu_custom_call.1} parent=1 // pred_check_branch
      %28 = sbr.rel (0) target = $region13
    $region12: #{tpu_custom_call.1} parent=1 // pred_region
      %30 = vsyncadd [#allocation4], 0
      %s32 = sshll.u32 [#allocation5], 4
      %s33 = int_to_ptr.vmem [resolvable:$true] %s32
      %s34 = sshll.u32 %s1, 4
      %s35 = int_to_ptr.hbm [resolvable:$true] %s34
      %37 = dma.vmem_to_hbm [thread:$0]  %s33, 128, %s35, [#allocation4]
    $region13: #{tpu_custom_call.1} parent=1 // pred_fallthru
      _
    // Predicated region
    $region14: #{tpu_custom_call.1} parent=1 // pred_check
      _
    $region15: #{tpu_custom_call.1} parent=1 // pred_check_branch
      %39 = sbr.rel (0) target = $region17
    $region16: #{tpu_custom_call.1} parent=1 // pred_region
      %41 = dma.done [#allocation4], 128
    $region17: #{tpu_custom_call.1} parent=1 // pred_fallthru
      _
    %42 = vsyncpa [#allocation3], 1
    %43 = vsyncpa [#allocation4], 1

</llo_original>
